<compile_context>
chip_gen: v7x
topology: tpu7x:2x2x1
jax: 0.10.0
libtpu: 0.0.40
codegen_flags: <defaults>
</compile_context>

<pallas_src>
import functools
import math

import jax
import jax.numpy as jnp
from jax import lax
from jax.experimental import pallas as pl
from jax.experimental.pallas import tpu as pltpu


def _round_up(x, m):
    return ((x + m - 1) // m) * m


def _cdiv(a, b):
    return -(-a // b)


def _label_smoothing_kernel(x_ref, tgt_ref, loss_ref, td_ref, acc_ref, *,
                            n_rows, size, padding_idx, confidence, smooth_val,
                            log_conf, log_smooth):
    """One (TN, TV) tile: emit the true_dist tile and accumulate the KL(sum) partial."""
    i = pl.program_id(0)                      # row-tile axis ("parallel")
    j = pl.program_id(1)                      # class-tile axis (trailing reduction)
    tn, tv = x_ref.shape

    x = x_ref[...].astype(jnp.float32)        # (TN, TV), cast from native dtype
    tgt = tgt_ref[...]                        # (TN, 1) int32

    # Local (per-tile) coordinates; shift the scalars instead of the full-width iota.
    col = lax.broadcasted_iota(jnp.int32, (tn, tv), 1)   # lane index within the tile
    row = lax.broadcasted_iota(jnp.int32, (tn, 1), 0)    # sublane index within the tile

    col_off = j * tv
    tgt_local = tgt - col_off                            # (TN, 1)
    size_local = jnp.int32(size) - col_off               # scalar
    pad_local = jnp.int32(padding_idx) - col_off         # scalar
    row_limit = jnp.int32(n_rows) - i * tn               # scalar

    # (TN, 1) row validity: in-bounds row AND target != padding_idx (index_fill_ rows).
    row_ok = (row < row_limit) & (tgt != jnp.int32(padding_idx))
    # (TN, TV) lane validity: in-bounds class AND class != padding_idx column.
    lane_ok = (col < size_local) & (col != pad_local)
    valid = lane_ok & row_ok                             # broadcast (TN,1) -> (TN,TV)
    is_true = col == tgt_local                           # scatter_(1, target, confidence)

    conf = jnp.float32(confidence)
    smth = jnp.float32(smooth_val)

    # true_dist tile — only two distinct nonzero values, both compile-time constants.
    td = jnp.where(valid, jnp.where(is_true, conf, smth), 0.0)
    td_ref[...] = td.astype(td_ref.dtype)

    # KLDivLoss(reduction='sum'): sum td * (log td - x) with 0 * log 0 := 0.
    # log(td) is a trace-time constant per branch -> no per-element transcendental.
    sel_log = jnp.where(is_true, jnp.float32(log_conf), jnp.float32(log_smooth))
    if smooth_val > 0.0 and confidence > 0.0:
        kl_mask = valid
    elif confidence > 0.0:        # smoothing == 0: only the true lane contributes
        kl_mask = valid & is_true
    elif smooth_val > 0.0:        # confidence == 0: only the smooth lanes contribute
        kl_mask = valid & jnp.logical_not(is_true)
    else:
        kl_mask = jnp.zeros_like(valid)
    # Final select guards 0 * (log - x) -> NaN when x is -inf in masked lanes.
    kl = jnp.where(kl_mask, td * (sel_log - x), 0.0)

    # Lane-preserving accumulation: fold TV lanes into a 128-lane accumulator with
    # plain VPU adds; no cross-lane (XLU) reduce and no scalar RMW per grid step.
    @pl.when(j == 0)
    def _():
        acc_ref[...] = jnp.zeros_like(acc_ref)

    partial = kl[:, 0:128]
    for c in range(1, tv // 128):
        partial = partial + kl[:, c * 128:(c + 1) * 128]
    acc_ref[...] += partial

    # Single cross-lane reduce + scalar store, once per row tile.
    @pl.when(j == pl.num_programs(1) - 1)
    def _():
        loss_ref[...] = jnp.zeros_like(loss_ref) + jnp.sum(acc_ref[...])


def label_smoothing_loss(x, target, *, size, padding_idx, smoothing=0.0,
                         tn_max=512, tv_max=2048):
    """Pallas equivalent of LabelSmoothing.forward. Returns (loss_scalar, true_dist)."""
    N, V = x.shape
    assert V == size, "x.shape[1] must equal `size`"
    assert size > 2, "smoothing / (size - 2) requires size > 2"

    confidence = 1.0 - smoothing
    smooth_val = smoothing / (size - 2)
    # Guarded trace-time logs; a zero-valued td lane contributes exactly 0 (masked).
    log_conf = math.log(confidence) if confidence > 0.0 else 0.0
    log_smooth = math.log(smooth_val) if smooth_val > 0.0 else 0.0

    # Column (class) tiling: lane-dense, balanced so the edge tile wastes < 128 lanes.
    v128 = _round_up(V, 128)
    n_col = _cdiv(v128, tv_max)
    TV = _round_up(_cdiv(v128, n_col), 128)
    C = _cdiv(V, TV)

    # Row tiling: sublane-aligned; use >= 2 row tiles for larger batches so the
    # "parallel" row axis can be sharded across both TensorCores on v7x megacore.
    n8 = _round_up(N, 8)
    n_row = _cdiv(n8, tn_max)
    if n_row < 2 and N >= 128:
        n_row = 2
    TN = _round_up(_cdiv(n8, n_row), 8)
    R = _cdiv(N, TN)

    x_itemsize = jnp.dtype(x.dtype).itemsize
    # Double-buffered x + true_dist tiles, plus the f32 lane accumulator and headroom.
    footprint = 2 * (TN * TV * x_itemsize * 2) + TN * 128 * 4
    vmem_limit = int(min(max(footprint + (8 << 20), 32 << 20), 100 << 20))

    tgt2d = target.reshape(N, 1).astype(jnp.int32)

    kernel = functools.partial(
        _label_smoothing_kernel,
        n_rows=N, size=size, padding_idx=padding_idx,
        confidence=confidence, smooth_val=smooth_val,
        log_conf=log_conf, log_smooth=log_smooth)

    loss_parts, true_dist = pl.pallas_call(
        kernel,
        grid_spec=pltpu.PrefetchScalarGridSpec(
            num_scalar_prefetch=0,
            grid=(R, C),                                      # reduction (class) axis last
            in_specs=[
                pl.BlockSpec((TN, TV), lambda i, j: (i, j)),  # x tile (native dtype)
                pl.BlockSpec((TN, 1), lambda i, j: (i, 0)),   # per-row targets
            ],
            out_specs=(
                # per-row-tile loss partial; block resident across j, written at last j
                pl.BlockSpec((1, 1, 1), lambda i, j: (i, 0, 0)),
                # true_dist tile, identical blocking to x (lane-dense stores)
                pl.BlockSpec((TN, TV), lambda i, j: (i, j)),
            ),
            scratch_shapes=[pltpu.VMEM((TN, 128), jnp.float32)],  # lane-wise loss acc
        ),
        out_shape=(
            jax.ShapeDtypeStruct((R, 1, 1), jnp.float32),
            jax.ShapeDtypeStruct((N, V), x.dtype),
        ),
        compiler_params=pltpu.CompilerParams(
            dimension_semantics=("parallel", "arbitrary"),
            vmem_limit_bytes=vmem_limit,
        ),
    )(x, tgt2d)

    return jnp.sum(loss_parts), true_dist


def _reference(x, target, *, size, padding_idx, smoothing):
    """Pure-JAX reference mirroring the PyTorch module."""
    N, V = x.shape
    confidence = 1.0 - smoothing
    td = jnp.full((N, V), smoothing / (size - 2), jnp.float32)
    td = td.at[jnp.arange(N), target].set(confidence)
    td = td.at[:, padding_idx].set(0.0)
    td = jnp.where((target == padding_idx)[:, None], 0.0, td)
    kl = jnp.where(td > 0, td * (jnp.log(jnp.where(td > 0, td, 1.0)) - x), 0.0)
    return jnp.sum(kl), td


if __name__ == "__main__":
    # Module config (deterministic, synthetic, small; intentionally NOT tile-aligned to
    # exercise the in-kernel edge-block masking path).
    size = 37          # vocab / class dimension
    padding_idx = 0
    smoothing = 0.1
    N = 10             # batch of rows

    key = jax.random.PRNGKey(0)
    kx, kt = jax.random.split(key)

    logits = jax.random.normal(kx, (N, size), dtype=jnp.float32)
    x = jax.nn.log_softmax(logits, axis=-1)            # KLDivLoss expects log-probs
    target = jax.random.randint(kt, (N,), 0, size, dtype=jnp.int32)
    target = target.at[3].set(padding_idx)             # include a padded row

    loss, true_dist = label_smoothing_loss(
        x, target, size=size, padding_idx=padding_idx, smoothing=smoothing)
    jax.block_until_ready((loss, true_dist))

    ref_loss, ref_td = _reference(
        x, target, size=size, padding_idx=padding_idx, smoothing=smoothing)

    assert jnp.allclose(loss, ref_loss, rtol=1e-5, atol=1e-5), (loss, ref_loss)
    assert jnp.allclose(true_dist, ref_td, rtol=1e-6, atol=1e-6)

    print("KERNEL_OK")
</pallas_src>

<mosaic_0001>
module attributes {stable_mosaic.version = 11 : i64} {
  func.func @_label_smoothing_kernel(%arg0: i32, %arg1: i32, %arg2: memref<16x128xf32, #tpu.memory_space<vmem>>, %arg3: memref<16x1xi32, #tpu.memory_space<vmem>>, %arg4: memref<1x1x1xf32, #tpu.memory_space<vmem>>, %arg5: memref<16x128xf32, #tpu.memory_space<vmem>>, %arg6: memref<16x128xf32, #tpu.memory_space<vmem>>) attributes {dimension_semantics = [#tpu.dimension_semantics<parallel>, #tpu.dimension_semantics<arbitrary>], iteration_bounds = array<i64: 1, 1>, scalar_prefetch = 0 : i64, scratch_operands = 1 : i64, tpu.core_type = #tpu.core_type<tc>, window_params = [{transform_indices = @transform_0, window_bounds = array<i64: 16, 128>}, {transform_indices = @transform_1, window_bounds = array<i64: 16, 1>}, {transform_indices = @transform_2, window_bounds = array<i64: 1, 1, 1>}, {transform_indices = @transform_3, window_bounds = array<i64: 16, 128>}]} {
    %c0 = arith.constant 0 : index
    %c0_0 = arith.constant 0 : index
    %0 = vector.load %arg2[%c0, %c0_0] : memref<16x128xf32, #tpu.memory_space<vmem>>, vector<16x128xf32>
    %c0_1 = arith.constant 0 : index
    %c0_2 = arith.constant 0 : index
    %1 = vector.load %arg3[%c0_1, %c0_2] : memref<16x1xi32, #tpu.memory_space<vmem>>, vector<16x1xi32>
    %2 = tpu.iota {dimensions = array<i32: 1>} : vector<16x128xi32>
    %3 = tpu.iota {dimensions = array<i32: 0>} : vector<16x1xi32>
    %c128_i32 = arith.constant 128 : i32
    %4 = arith.muli %arg1, %c128_i32 : i32
    %5 = vector.broadcast %4 : i32 to vector<16x1xi32>
    %6 = arith.subi %1, %5 : vector<16x1xi32>
    %c37_i32 = arith.constant 37 : i32
    %7 = arith.subi %c37_i32, %4 : i32
    %c0_i32 = arith.constant 0 : i32
    %8 = arith.subi %c0_i32, %4 : i32
    %c16_i32 = arith.constant 16 : i32
    %9 = arith.muli %arg0, %c16_i32 : i32
    %c10_i32 = arith.constant 10 : i32
    %10 = arith.subi %c10_i32, %9 : i32
    %11 = vector.broadcast %10 : i32 to vector<16x1xi32>
    %12 = arith.cmpi slt, %3, %11 : vector<16x1xi32>
    %c0_i32_3 = arith.constant 0 : i32
    %13 = vector.broadcast %c0_i32_3 : i32 to vector<16x1xi32>
    %14 = arith.cmpi ne, %1, %13 : vector<16x1xi32>
    %15 = arith.andi %12, %14 : vector<16x1xi1>
    %16 = vector.broadcast %7 : i32 to vector<16x128xi32>
    %17 = arith.cmpi slt, %2, %16 : vector<16x128xi32>
    %18 = vector.broadcast %8 : i32 to vector<16x128xi32>
    %19 = arith.cmpi ne, %2, %18 : vector<16x128xi32>
    %20 = arith.andi %17, %19 : vector<16x128xi1>
    %21 = vector.broadcast %15 : vector<16x1xi1> to vector<16x128xi1>
    %22 = arith.andi %20, %21 : vector<16x128xi1>
    %23 = vector.broadcast %6 : vector<16x1xi32> to vector<16x128xi32>
    %24 = arith.cmpi eq, %2, %23 : vector<16x128xi32>
    %cst = arith.constant 0.899999976 : f32
    %cst_4 = arith.constant 0.00285714283 : f32
    %25 = vector.broadcast %cst : f32 to vector<16x128xf32>
    %26 = vector.broadcast %cst_4 : f32 to vector<16x128xf32>
    %27 = arith.select %24, %25, %26 : vector<16x128xi1>, vector<16x128xf32>
    %cst_5 = arith.constant 0.000000e+00 : f32
    %28 = vector.broadcast %cst_5 : f32 to vector<16x128xf32>
    %29 = arith.select %22, %27, %28 : vector<16x128xi1>, vector<16x128xf32>
    %c0_6 = arith.constant 0 : index
    %c0_7 = arith.constant 0 : index
    %30 = vector.load %arg5[%c0_6, %c0_7] : memref<16x128xf32, #tpu.memory_space<vmem>>, vector<16x128xf32>
    tpu.vector_store %arg5[%c0_6, %c0_7], %29 {strides = array<i32>} : memref<16x128xf32, #tpu.memory_space<vmem>>, vector<16x128xf32>,
    %cst_8 = arith.constant -0.105360515 : f32
    %cst_9 = arith.constant -5.85793304 : f32
    %31 = vector.broadcast %cst_8 : f32 to vector<16x128xf32>
    %32 = vector.broadcast %cst_9 : f32 to vector<16x128xf32>
    %33 = arith.select %24, %31, %32 : vector<16x128xi1>, vector<16x128xf32>
    %34 = arith.subf %33, %0 : vector<16x128xf32>
    %35 = arith.mulf %29, %34 : vector<16x128xf32>
    %cst_10 = arith.constant 0.000000e+00 : f32
    %36 = vector.broadcast %cst_10 : f32 to vector<16x128xf32>
    %37 = arith.select %22, %35, %36 : vector<16x128xi1>, vector<16x128xf32>
    %c0_i32_11 = arith.constant 0 : i32
    %38 = arith.cmpi eq, %arg1, %c0_i32_11 : i32
    %39 = arith.extui %38 : i1 to i32
    %c0_i32_12 = arith.constant 0 : i32
    %40 = arith.cmpi ne, %39, %c0_i32_12 : i32
    scf.if %40 {
      %cst_19 = arith.constant 0.000000e+00 : f32
      %47 = vector.broadcast %cst_19 : f32 to vector<16x128xf32>
      %c0_20 = arith.constant 0 : index
      %c0_21 = arith.constant 0 : index
      %48 = vector.load %arg6[%c0_20, %c0_21] : memref<16x128xf32, #tpu.memory_space<vmem>>, vector<16x128xf32>
      tpu.vector_store %arg6[%c0_20, %c0_21], %47 {strides = array<i32>} : memref<16x128xf32, #tpu.memory_space<vmem>>, vector<16x128xf32>,
    } else {
    }
    %c0_13 = arith.constant 0 : index
    %c0_14 = arith.constant 0 : index
    %41 = vector.load %arg6[%c0_13, %c0_14] : memref<16x128xf32, #tpu.memory_space<vmem>>, vector<16x128xf32>
    %42 = arith.addf %41, %37 : vector<16x128xf32>
    %c0_15 = arith.constant 0 : index
    %c0_16 = arith.constant 0 : index
    %43 = vector.load %arg6[%c0_15, %c0_16] : memref<16x128xf32, #tpu.memory_space<vmem>>, vector<16x128xf32>
    tpu.vector_store %arg6[%c0_15, %c0_16], %42 {strides = array<i32>} : memref<16x128xf32, #tpu.memory_space<vmem>>, vector<16x128xf32>,
    %c0_i32_17 = arith.constant 0 : i32
    %44 = arith.cmpi eq, %arg1, %c0_i32_17 : i32
    %45 = arith.extui %44 : i1 to i32
    %c0_i32_18 = arith.constant 0 : i32
    %46 = arith.cmpi ne, %45, %c0_i32_18 : i32
    scf.if %46 {
      %cst_19 = arith.constant 0.000000e+00 : f32
      %47 = vector.broadcast %cst_19 : f32 to vector<1x1x1xf32>
      %c0_20 = arith.constant 0 : index
      %c0_21 = arith.constant 0 : index
      %48 = vector.load %arg6[%c0_20, %c0_21] : memref<16x128xf32, #tpu.memory_space<vmem>>, vector<16x128xf32>
      %49 = vector.shape_cast %48 : vector<16x128xf32> to vector<1x16x128xf32>
      %cst_22 = arith.constant dense<0.000000e+00> : vector<1xf32>
      %50 = vector.multi_reduction <add>, %49, %cst_22 [1, 2] : vector<1x16x128xf32> to vector<1xf32>
      %51 = vector.shape_cast %50 : vector<1xf32> to vector<1x1x1xf32>
      %52 = vector.extract %51[0, 0, 0] : f32 from vector<1x1x1xf32>
      %53 = vector.broadcast %52 : f32 to vector<1x1x1xf32>
      %54 = arith.addf %47, %53 : vector<1x1x1xf32>
      %c0_23 = arith.constant 0 : index
      %c0_24 = arith.constant 0 : index
      %c0_25 = arith.constant 0 : index
      %55 = vector.load %arg4[%c0_23, %c0_24, %c0_25] : memref<1x1x1xf32, #tpu.memory_space<vmem>>, vector<1x1x1xf32>
      tpu.vector_store %arg4[%c0_23, %c0_24, %c0_25], %54 {strides = array<i32>} : memref<1x1x1xf32, #tpu.memory_space<vmem>>, vector<1x1x1xf32>,
    } else {
    }
    return
  }
  func.func @transform_0(%arg0: i32, %arg1: i32) -> (i32, i32) {
    %c0_i32 = arith.constant 0 : i32
    return %arg0, %arg1 : i32, i32
  }
  func.func @transform_1(%arg0: i32, %arg1: i32) -> (i32, i32) {
    %c0_i32 = arith.constant 0 : i32
    %c0_i32_0 = arith.constant 0 : i32
    return %arg0, %c0_i32 : i32, i32
  }
  func.func @transform_2(%arg0: i32, %arg1: i32) -> (i32, i32, i32) {
    %c0_i32 = arith.constant 0 : i32
    %c0_i32_0 = arith.constant 0 : i32
    %c0_i32_1 = arith.constant 0 : i32
    return %arg0, %c0_i32, %c0_i32_0 : i32, i32, i32
  }
  func.func @transform_3(%arg0: i32, %arg1: i32) -> (i32, i32) {
    %c0_i32 = arith.constant 0 : i32
    return %arg0, %arg1 : i32, i32
  }
}

</mosaic_0001>

<llo_original>
// kernel: tpu_custom_call.1
$region0: #{tpu_custom_call.1}
  #allocation0 [shape = 'u32[]', space=smem, size = 0x4, offset = 0x4, fixed_abs, tag = 'smem constant byte address 0x4 - core index']
  #allocation1 [shape = 'u32[144,128]{1,0:T(1,128)}', space=vmem, size = 0x12000, scoped, tag = 'internal scratch']
  #allocation2 [shape = 'f32[16,128]{1,0:T(8,128)}', space=vmem, size = 0x2000, scoped, tag = 'scratch operand']
  %s0 = inlined_call_operand.vmem [shape: f32[10,37], index: 0, kind: input, shape index: {}]
  %s1 = inlined_call_operand.vmem [shape: s32[10,1], index: 1, kind: input, shape index: {}]
  %s2 = inlined_call_operand.hbm [shape: f32[1,1,1], index: 2, kind: output, shape index: {0}]
  %s3 = inlined_call_operand.hbm [shape: f32[10,37], index: 3, kind: output, shape index: {1}]
  %4 = xla_tuple %s2, %s3
  %s5 = sld [smem:[#allocation0]]
  $region34: #{tpu_custom_call.1} parent=0
    _
  %s7 = ssub.s32 1, %s5
  %s8 = scalar_select 0, %s7, %s5
  $region1: #{tpu_custom_call.1} parent=0
    #allocation3 [shape = 'u8[512]{0}', space=vmem, size = 0x400, scoped, tag = 'output window, operand 0, single buffered']
    #allocation4 [shape = 's32[1]{0}', space=sflag, size = 0x4, scoped, tag = 'scoped memory for tpu_custom_call.1']
    #allocation5 [shape = 'u8[8192]{0}', space=vmem, size = 0x2000, scoped, tag = 'output window, operand 1, single buffered']
    #allocation6 [shape = 's32[1]{0}', space=sflag, size = 0x4, scoped, tag = 'scoped memory for tpu_custom_call.1']
    %9 = vsyncpa [#allocation4], 0
    %10 = vsyncpa [#allocation6], 0
    // Predicated region
    $region2: #{tpu_custom_call.1} parent=1 // pred_check
      _
    $region3: #{tpu_custom_call.1} parent=1 // pred_check_branch
      %12 = sbr.rel (0) target = $region5
    $region4: #{tpu_custom_call.1} parent=1 // pred_region
      _
    $region5: #{tpu_custom_call.1} parent=1 // pred_fallthru
      _
    // Predicated region
    $region6: #{tpu_custom_call.1} parent=1 // pred_check
      _
    $region7: #{tpu_custom_call.1} parent=1 // pred_check_branch
      %14 = sbr.rel (0) target = $region9
    $region8: #{tpu_custom_call.1} parent=1 // pred_region
      _
    $region9: #{tpu_custom_call.1} parent=1 // pred_fallthru
      _
    %v15 = vld [vmem:[%s0] sm:$0xff]
    %v16 = vld [vmem:[%s0 + $0x8] sm:$0xff]
    %v17 = vld [vmem:[%s1] sm:$0xff]
    %v18 = vld [vmem:[%s1 + $0x8] sm:$0xff]
    %v19 = vlaneseq
    %v20 = vand.u32 %v19, 127
    %v21 = vlaneseq
    %v22 = vshrl.u32 %v21, 7
    %v23 = vadd.s32 %v22, 8
    %s24 = smul.u32 0, 128
    %v25 = vstv %s24
    %v26 = vsub.s32 %v17, %v25
    %v27 = vsub.s32 %v18, %v25
    %s28 = ssub.s32 37, %s24
    %s29 = ssub.s32 0, %s24
    %s30 = smul.u32 0, 16
    %s31 = ssub.s32 10, %s30
    %v32 = vstv %s31
    %vm33 = vcmp.lt.s32.totalorder %v22, %v32
    %vm34 = vcmp.lt.s32.totalorder %v23, %v32
    %vm35 = vcmp.ne.s32.totalorder %v17, 0
    %vm36 = vcmp.ne.s32.totalorder %v18, 0
    %vm37 = vmand %vm33, %vm35
    %vm38 = vmand %vm34, %vm36
    %v39 = vstv %s28
    %vm40 = vcmp.lt.s32.totalorder %v20, %v39
    %v41 = vstv %s29
    %vm42 = vcmp.ne.s32.totalorder %v20, %v41
    %vm43 = vmand %vm40, %vm42
    %v44 = vsel %vm37, 1, 0
    %v45 = vsel %vm38, 1, 0
    %46 = vset.pattern.permute.xlu0 0
    %47 = vperm.xlu0 %46, %v44
    %v48 = vpop.permute.xlu0 %47
    %49 = vset.pattern.permute.xlu0 0
    %50 = vperm.xlu0 %49, %v45
    %v51 = vpop.permute.xlu0 %50
    %vm52 = vcmp.eq.s32.totalorder %v48, 1
    %vm53 = vcmp.eq.s32.totalorder %v51, 1
    %vm54 = vmand %vm43, %vm52
    %vm55 = vmand %vm43, %vm53
    %56 = vset.pattern.permute.xlu0 0
    %57 = vperm.xlu0 %56, %v26
    %v58 = vpop.permute.xlu0 %57
    %59 = vset.pattern.permute.xlu0 0
    %60 = vperm.xlu0 %59, %v27
    %v61 = vpop.permute.xlu0 %60
    %vm62 = vcmp.eq.s32.totalorder %v20, %v58
    %vm63 = vcmp.eq.s32.totalorder %v20, %v61
    %v64 = vsel %vm62, 0.9, 0.0028571428
    %v65 = vsel %vm63, 0.9, 0.0028571428
    %v66 = vsel %vm54, %v64, 0.0
    %v67 = vsel %vm55, %v65, 0.0
    %68 = vst [vmem:[#allocation5] sm:$0xff] %v66
    %69 = vst [vmem:[#allocation5 + $0x8] sm:$0xff] %v67
    %v70 = vsel %vm62, -0.105360515, -5.857933
    %v71 = vsel %vm63, -0.105360515, -5.857933
    %v72 = vsub.f32 %v70, %v15
    %v73 = vsub.f32 %v71, %v16
    %v74 = vmul.f32 %v66, %v72
    %v75 = vmul.f32 %v67, %v73
    %v76 = vsel %vm54, %v74, 0.0
    %v77 = vsel %vm55, %v75, 0.0
    %p78 = scmp.eq.s32.totalorder 0, 0
    // Predicated region
    $region10: #{tpu_custom_call.1} parent=1 // pred_check
      %p79 = pneg %p78
    $region11: #{tpu_custom_call.1} parent=1 // pred_check_branch
      %81 = sbr.rel (%p79) target = $region13
    $region12: #{tpu_custom_call.1} parent=1 // pred_region
      %82 = vst [vmem:[#allocation2] sm:$0xff] 0.0
      %83 = vst [vmem:[#allocation2 + $0x8] sm:$0xff] 0.0
    $region13: #{tpu_custom_call.1} parent=1 // pred_fallthru
      _
    %v84 = vld [vmem:[#allocation2] sm:$0xff]
    %v85 = vld [vmem:[#allocation2 + $0x8] sm:$0xff]
    %v86 = vadd.f32 %v84, %v76
    %v87 = vadd.f32 %v85, %v77
    %88 = vst [vmem:[#allocation2] sm:$0xff] %v86
    %89 = vst [vmem:[#allocation2 + $0x8] sm:$0xff] %v87
    // Predicated region
    $region14: #{tpu_custom_call.1} parent=1 // pred_check
      %p90 = pneg %p78
    $region15: #{tpu_custom_call.1} parent=1 // pred_check_branch
      %92 = sbr.rel (%p90) target = $region17
    $region16: #{tpu_custom_call.1} parent=1 // pred_region
      %v93 = vld [vmem:[#allocation2] sm:$0xff]
      %v94 = vld [vmem:[#allocation2 + $0x8] sm:$0xff]
      %v95 = vadd.f32 %v93, %v94
      %96 = vadd.xlane.f32.xlu0 %v95
      %v97 = vpop.xlane.xlu0 %96
      %v98 = vrot.slane %v97, 4
      %v99 = vadd.f32 %v97, %v98
      %v100 = vrot.slane %v99, 2
      %v101 = vadd.f32 %v99, %v100
      %v102 = vrot.slane %v101, 1
      %v103 = vadd.f32 %v101, %v102
      %s104 = vtos %v103
      %v105 = vstv %s104
      %v106 = vadd.f32 %v105, 0.0
      %vm107 = vcmask 0
      %108 = vst.msk [vmem:[#allocation3] sm:$0x1] %vm107, %v106
    $region17: #{tpu_custom_call.1} parent=1 // pred_fallthru
      _
    // Predicated region
    $region18: #{tpu_custom_call.1} parent=1 // pred_check
      _
    $region19: #{tpu_custom_call.1} parent=1 // pred_check_branch
      %110 = sbr.rel (0) target = $region21
    $region20: #{tpu_custom_call.1} parent=1 // pred_region
      %s112 = ssub.s32 16, 16
      %113 = vsyncadd [#allocation4], %s112
      %s115 = sshll.u32 [#allocation3], 4
      %s116 = int_to_ptr.vmem [resolvable:$true] %s115
      %118 = dma.vmem_to_hbm [thread:$0]  %s116, 16, %s2, [#allocation4]
    $region21: #{tpu_custom_call.1} parent=1 // pred_fallthru
      _
    // Predicated region
    $region22: #{tpu_custom_call.1} parent=1 // pred_check
      _
    $region23: #{tpu_custom_call.1} parent=1 // pred_check_branch
      %120 = sbr.rel (0) target = $region25
    $region24: #{tpu_custom_call.1} parent=1 // pred_region
      %s122 = ssub.s32 256, 256
      %123 = vsyncadd [#allocation6], %s122
      %s124 = sshll.u32 [#allocation5], 4
      %s125 = int_to_ptr.vmem [resolvable:$true] %s124
      %130 = dma.vmem_to_hbm [thread:$0]  %s125, 256, %s3, [#allocation6], 128, 128, 8
    $region25: #{tpu_custom_call.1} parent=1 // pred_fallthru
      _
    // Predicated region
    $region26: #{tpu_custom_call.1} parent=1 // pred_check
      _
    $region27: #{tpu_custom_call.1} parent=1 // pred_check_branch
      %132 = sbr.rel (0) target = $region29
    $region28: #{tpu_custom_call.1} parent=1 // pred_region
      %133 = dma.done [#allocation4], 16
    $region29: #{tpu_custom_call.1} parent=1 // pred_fallthru
      _
    // Predicated region
    $region30: #{tpu_custom_call.1} parent=1 // pred_check
      _
    $region31: #{tpu_custom_call.1} parent=1 // pred_check_branch
      %135 = sbr.rel (0) target = $region33
    $region32: #{tpu_custom_call.1} parent=1 // pred_region
      %136 = dma.done [#allocation6], 256
    $region33: #{tpu_custom_call.1} parent=1 // pred_fallthru
      _
    %137 = vsyncpa [#allocation4], 1
    %138 = vsyncpa [#allocation6], 1

</llo_original>
